<compile_context>
chip_gen: v7x
topology: tpu7x:2x2x1
jax: 0.10.0
libtpu: 0.0.40
codegen_flags: <defaults>
</compile_context>

<pallas_src>
import jax
import jax.numpy as jnp
from jax.experimental import pallas as pl
from jax.experimental.pallas import tpu as pltpu

LANE = 128        # vreg lane width
MAX_TILE_B = 512  # batch tile on the lane axis (multiple of 128)
NUM_PARAMS = 16   # packed param slots (9 used, rest padding)


def xornet_kernel(params_ref, xT_ref, y_ref, yr_ref):
    """One batch tile of the full forward pass.

    params_ref: (16,) f32 in SMEM:
        [w1_00, w1_01, w1_10, w1_11, b1_0, b1_1, w2_0, w2_1, b2, pad...]
        where w1 is stored (in, out), i.e. h_j = x0*w1[0,j] + x1*w1[1,j] + b1[j].
    xT_ref : (2, TB) f32 in VMEM  -- batch on the lane axis.
    y_ref  : (1, TB) f32          -- sigmoid output (forward).
    yr_ref : (1, TB) f32          -- rounded output (predict), fused here.
    """
    x0 = xT_ref[0:1, :]          # (1, TB)
    x1 = xT_ref[1:2, :]          # (1, TB)

    w1_00 = params_ref[0]
    w1_01 = params_ref[1]
    w1_10 = params_ref[2]
    w1_11 = params_ref[3]
    b1_0 = params_ref[4]
    b1_1 = params_ref[5]
    w2_0 = params_ref[6]
    w2_1 = params_ref[7]
    b2 = params_ref[8]

    # Layer 1: two broadcast FMAs per hidden unit + sigmoid (VPU + EUP, no MXU).
    h0 = jax.nn.sigmoid(x0 * w1_00 + x1 * w1_10 + b1_0)    # (1, TB)
    h1 = jax.nn.sigmoid(x0 * w1_01 + x1 * w1_11 + b1_1)    # (1, TB)

    # Layer 2: single output unit.
    y = jax.nn.sigmoid(h0 * w2_0 + h1 * w2_1 + b2)          # (1, TB)

    y_ref[...] = y
    yr_ref[...] = jnp.round(y)   # fused torch.round for predict()


def _forward_impl(x, params):
    """x: (B, 2) f32; params: (16,) f32. Returns (y, y_rounded), each (B, 1)."""
    B = x.shape[0]
    # Lane-aligned batch tile; pad B up to a multiple of the tile.
    tb = min(MAX_TILE_B, ((B + LANE - 1) // LANE) * LANE)
    padded_b = ((B + tb - 1) // tb) * tb
    xT = jnp.pad(x.astype(jnp.float32).T, ((0, 0), (0, padded_b - B)))  # (2, padded_b)

    y, yr = pl.pallas_call(
        xornet_kernel,
        out_shape=(jax.ShapeDtypeStruct((1, padded_b), jnp.float32),
                   jax.ShapeDtypeStruct((1, padded_b), jnp.float32)),
        grid=(padded_b // tb,),
        in_specs=[
            # Packed scalars: one tiny SMEM input, carried whole to every step.
            pl.BlockSpec(memory_space=pltpu.MemorySpace.SMEM),
            # x^T batch tile: batch on the lane axis, lane-dense.
            pl.BlockSpec((2, tb), lambda i: (0, i)),
        ],
        out_specs=(pl.BlockSpec((1, tb), lambda i: (0, i)),
                   pl.BlockSpec((1, tb), lambda i: (0, i))),
        compiler_params=pltpu.CompilerParams(
            dimension_semantics=("parallel",)),
    )(params, xT)

    return y[:, :B].T, yr[:, :B].T   # each (B, 1)


def pack_params(w1, b1, w2, b2):
    """w1: (2,2) stored (in,out); b1: (2,); w2: (2,1) stored (in,out); b2: (1,)."""
    flat = jnp.concatenate([
        jnp.asarray(w1, jnp.float32).reshape(-1),   # w1_00, w1_01, w1_10, w1_11
        jnp.asarray(b1, jnp.float32).reshape(-1),   # b1_0, b1_1
        jnp.asarray(w2, jnp.float32).reshape(-1),   # w2_0, w2_1
        jnp.asarray(b2, jnp.float32).reshape(-1),   # b2
    ])
    return jnp.pad(flat, (0, NUM_PARAMS - flat.shape[0]))


def xornet_forward(x, w1, b1, w2, b2):
    y, _ = _forward_impl(x, pack_params(w1, b1, w2, b2))
    return y


def xornet_predict(x, w1, b1, w2, b2):
    _, yr = _forward_impl(x, pack_params(w1, b1, w2, b2))
    return yr


def init_params(key):
    # Deterministic init mimicking nn.Linear's U(-1/sqrt(fan_in), 1/sqrt(fan_in)).
    k1, k2, k3, k4 = jax.random.split(key, 4)
    bound = 1.0 / jnp.sqrt(2.0)  # fan_in = 2 for both layers
    # Weights stored already transposed to (in, out) vs PyTorch's (out, in).
    w1 = jax.random.uniform(k1, (2, 2), jnp.float32, -bound, bound)
    b1 = jax.random.uniform(k2, (2,), jnp.float32, -bound, bound)
    w2 = jax.random.uniform(k3, (2, 1), jnp.float32, -bound, bound)
    b2 = jax.random.uniform(k4, (1,), jnp.float32, -bound, bound)
    return w1, b1, w2, b2


if __name__ == "__main__":
    key = jax.random.PRNGKey(0)
    pkey, xkey, bkey = jax.random.split(key, 3)
    w1, b1, w2, b2 = init_params(pkey)

    def ref_fwd(x):
        return jax.nn.sigmoid(jax.nn.sigmoid(x @ w1 + b1) @ w2 + b2)

    # Small batch: the 4 canonical XOR corners + 4 random points.
    corners = jnp.array([[0., 0.], [0., 1.], [1., 0.], [1., 1.]], dtype=jnp.float32)
    extra = jax.random.uniform(xkey, (4, 2), jnp.float32)
    x = jnp.concatenate([corners, extra], axis=0)  # (8, 2)

    out = jax.block_until_ready(xornet_forward(x, w1, b1, w2, b2))
    assert out.shape == (8, 1)
    assert jnp.allclose(out, ref_fwd(x), atol=1e-5)

    preds = jax.block_until_ready(xornet_predict(x, w1, b1, w2, b2))
    assert preds.shape == (8, 1)
    assert jnp.allclose(preds, jnp.round(ref_fwd(x)))

    # Larger batch to exercise the lane-aligned batch grid (tb=512, 2 steps).
    x_big = jax.random.uniform(bkey, (1000, 2), jnp.float32)
    out_big = jax.block_until_ready(xornet_forward(x_big, w1, b1, w2, b2))
    assert out_big.shape == (1000, 1)
    assert jnp.allclose(out_big, ref_fwd(x_big), atol=1e-5)

    print("KERNEL_OK")
</pallas_src>

<mosaic_0001>
module attributes {stable_mosaic.version = 11 : i64} {
  func.func @xornet_kernel(%arg0: i32, %arg1: memref<16xf32, #tpu.memory_space<smem>>, %arg2: memref<2x128xf32, #tpu.memory_space<vmem>>, %arg3: memref<1x128xf32, #tpu.memory_space<vmem>>, %arg4: memref<1x128xf32, #tpu.memory_space<vmem>>) attributes {dimension_semantics = [#tpu.dimension_semantics<parallel>], iteration_bounds = array<i64: 1>, scalar_prefetch = 0 : i64, scratch_operands = 0 : i64, tpu.core_type = #tpu.core_type<tc>, window_params = [{transform_indices = @transform_0, window_bounds = array<i64: 16>}, {transform_indices = @transform_1, window_bounds = array<i64: 2, 128>}, {transform_indices = @transform_2, window_bounds = array<i64: 1, 128>}, {transform_indices = @transform_3, window_bounds = array<i64: 1, 128>}]} {
    %c0 = arith.constant 0 : index
    %c0_0 = arith.constant 0 : index
    %0 = vector.load %arg2[%c0, %c0_0] : memref<2x128xf32, #tpu.memory_space<vmem>>, vector<1x128xf32>
    %c1 = arith.constant 1 : index
    %c0_1 = arith.constant 0 : index
    %1 = vector.load %arg2[%c1, %c0_1] : memref<2x128xf32, #tpu.memory_space<vmem>>, vector<1x128xf32>
    %c0_2 = arith.constant 0 : index
    %2 = memref.load %arg1[%c0_2] : memref<16xf32, #tpu.memory_space<smem>>
    %c1_3 = arith.constant 1 : index
    %3 = memref.load %arg1[%c1_3] : memref<16xf32, #tpu.memory_space<smem>>
    %c2 = arith.constant 2 : index
    %4 = memref.load %arg1[%c2] : memref<16xf32, #tpu.memory_space<smem>>
    %c3 = arith.constant 3 : index
    %5 = memref.load %arg1[%c3] : memref<16xf32, #tpu.memory_space<smem>>
    %c4 = arith.constant 4 : index
    %6 = memref.load %arg1[%c4] : memref<16xf32, #tpu.memory_space<smem>>
    %c5 = arith.constant 5 : index
    %7 = memref.load %arg1[%c5] : memref<16xf32, #tpu.memory_space<smem>>
    %c6 = arith.constant 6 : index
    %8 = memref.load %arg1[%c6] : memref<16xf32, #tpu.memory_space<smem>>
    %c7 = arith.constant 7 : index
    %9 = memref.load %arg1[%c7] : memref<16xf32, #tpu.memory_space<smem>>
    %c8 = arith.constant 8 : index
    %10 = memref.load %arg1[%c8] : memref<16xf32, #tpu.memory_space<smem>>
    %11 = vector.broadcast %2 : f32 to vector<1x128xf32>
    %12 = arith.mulf %0, %11 : vector<1x128xf32>
    %13 = vector.broadcast %4 : f32 to vector<1x128xf32>
    %14 = arith.mulf %1, %13 : vector<1x128xf32>
    %15 = arith.addf %12, %14 : vector<1x128xf32>
    %16 = vector.broadcast %6 : f32 to vector<1x128xf32>
    %17 = arith.addf %15, %16 : vector<1x128xf32>
    %18 = arith.negf %17 : vector<1x128xf32>
    %19 = math.exp %18 : vector<1x128xf32>
    %cst = arith.constant 1.000000e+00 : f32
    %20 = vector.broadcast %cst : f32 to vector<1x128xf32>
    %21 = arith.addf %20, %19 : vector<1x128xf32>
    %22 = arith.divf %20, %21 : vector<1x128xf32>
    %23 = vector.broadcast %3 : f32 to vector<1x128xf32>
    %24 = arith.mulf %0, %23 : vector<1x128xf32>
    %25 = vector.broadcast %5 : f32 to vector<1x128xf32>
    %26 = arith.mulf %1, %25 : vector<1x128xf32>
    %27 = arith.addf %24, %26 : vector<1x128xf32>
    %28 = vector.broadcast %7 : f32 to vector<1x128xf32>
    %29 = arith.addf %27, %28 : vector<1x128xf32>
    %30 = arith.negf %29 : vector<1x128xf32>
    %31 = math.exp %30 : vector<1x128xf32>
    %cst_4 = arith.constant 1.000000e+00 : f32
    %32 = vector.broadcast %cst_4 : f32 to vector<1x128xf32>
    %33 = arith.addf %32, %31 : vector<1x128xf32>
    %34 = arith.divf %32, %33 : vector<1x128xf32>
    %35 = vector.broadcast %8 : f32 to vector<1x128xf32>
    %36 = arith.mulf %22, %35 : vector<1x128xf32>
    %37 = vector.broadcast %9 : f32 to vector<1x128xf32>
    %38 = arith.mulf %34, %37 : vector<1x128xf32>
    %39 = arith.addf %36, %38 : vector<1x128xf32>
    %40 = vector.broadcast %10 : f32 to vector<1x128xf32>
    %41 = arith.addf %39, %40 : vector<1x128xf32>
    %42 = arith.negf %41 : vector<1x128xf32>
    %43 = math.exp %42 : vector<1x128xf32>
    %cst_5 = arith.constant 1.000000e+00 : f32
    %44 = vector.broadcast %cst_5 : f32 to vector<1x128xf32>
    %45 = arith.addf %44, %43 : vector<1x128xf32>
    %46 = arith.divf %44, %45 : vector<1x128xf32>
    %c0_6 = arith.constant 0 : index
    %c0_7 = arith.constant 0 : index
    %47 = vector.load %arg3[%c0_6, %c0_7] : memref<1x128xf32, #tpu.memory_space<vmem>>, vector<1x128xf32>
    tpu.vector_store %arg3[%c0_6, %c0_7], %46 {strides = array<i32>} : memref<1x128xf32, #tpu.memory_space<vmem>>, vector<1x128xf32>,
    %48 = math.roundeven %46 : vector<1x128xf32>
    %c0_8 = arith.constant 0 : index
    %c0_9 = arith.constant 0 : index
    %49 = vector.load %arg4[%c0_8, %c0_9] : memref<1x128xf32, #tpu.memory_space<vmem>>, vector<1x128xf32>
    tpu.vector_store %arg4[%c0_8, %c0_9], %48 {strides = array<i32>} : memref<1x128xf32, #tpu.memory_space<vmem>>, vector<1x128xf32>,
    return
  }
  func.func @transform_0(%arg0: i32) -> i32 {
    %c0_i32 = arith.constant 0 : i32
    %c0_i32_0 = arith.constant 0 : i32
    return %c0_i32 : i32
  }
  func.func @transform_1(%arg0: i32) -> (i32, i32) {
    %c0_i32 = arith.constant 0 : i32
    %c0_i32_0 = arith.constant 0 : i32
    return %c0_i32, %arg0 : i32, i32
  }
  func.func @transform_2(%arg0: i32) -> (i32, i32) {
    %c0_i32 = arith.constant 0 : i32
    %c0_i32_0 = arith.constant 0 : i32
    return %c0_i32, %arg0 : i32, i32
  }
  func.func @transform_3(%arg0: i32) -> (i32, i32) {
    %c0_i32 = arith.constant 0 : i32
    %c0_i32_0 = arith.constant 0 : i32
    return %c0_i32, %arg0 : i32, i32
  }
}

</mosaic_0001>

<llo_original>
// kernel: tpu_custom_call.1
$region0: #{tpu_custom_call.1}
  #allocation0 [shape = 'u32[]', space=smem, size = 0x4, offset = 0x4, fixed_abs, tag = 'smem constant byte address 0x4 - core index']
  #allocation1 [shape = 'u32[144,128]{1,0:T(1,128)}', space=vmem, size = 0x12000, scoped, tag = 'internal scratch']
  %s0 = inlined_call_operand.hbm [shape: f32[16], index: 0, kind: input, shape index: {}]
  %s1 = inlined_call_operand.vmem [shape: f32[2,128], index: 1, kind: input, shape index: {}]
  %s2 = inlined_call_operand.hbm [shape: f32[1,128], index: 2, kind: output, shape index: {0}]
  %s3 = inlined_call_operand.hbm [shape: f32[1,128], index: 3, kind: output, shape index: {1}]
  %4 = xla_tuple %s2, %s3
  %s5 = sld [smem:[#allocation0]]
  $region30: #{tpu_custom_call.1} parent=0
    _
  %s7 = ssub.s32 1, %s5
  %s8 = scalar_select 0, %s7, %s5
  $region1: #{tpu_custom_call.1} parent=0
    #allocation2 [shape = 'u8[512]{0}', space=smem, size = 0x200, scoped, tag = 'input window, operand 0, single buffered']
    #allocation3 [shape = 's32[1]{0}', space=sflag, size = 0x4, scoped, tag = 'scoped memory for tpu_custom_call.1']
    #allocation4 [shape = 's32[1]{0}', space=sflag, size = 0x4, scoped, tag = 'scoped memory for tpu_custom_call.1']
    #allocation5 [shape = 'u8[512]{0}', space=vmem, size = 0x400, scoped, tag = 'output window, operand 0, single buffered']
    #allocation6 [shape = 'u8[512]{0}', space=vmem, size = 0x400, scoped, tag = 'output window, operand 1, single buffered']
    #allocation7 [shape = 's32[1]{0}', space=sflag, size = 0x4, scoped, tag = 'scoped memory for tpu_custom_call.1']
    %9 = vsyncpa [#allocation4], 0
    %10 = vsyncpa [#allocation3], 0
    %11 = vsyncpa [#allocation7], 0
    // Predicated region
    $region2: #{tpu_custom_call.1} parent=1 // pred_check
      _
    $region3: #{tpu_custom_call.1} parent=1 // pred_check_branch
      %13 = sbr.rel (0) target = $region5
    $region4: #{tpu_custom_call.1} parent=1 // pred_region
      %s15 = ssub.s32 16, 16
      %16 = vsyncadd [#allocation4], %s15
      %19 = dma.hbm_to_smem %s0, 16, [#allocation2], [#allocation4]
    $region5: #{tpu_custom_call.1} parent=1 // pred_fallthru
      _
    // Predicated region
    $region6: #{tpu_custom_call.1} parent=1 // pred_check
      _
    $region7: #{tpu_custom_call.1} parent=1 // pred_check_branch
      %21 = sbr.rel (0) target = $region9
    $region8: #{tpu_custom_call.1} parent=1 // pred_region
      _
    $region9: #{tpu_custom_call.1} parent=1 // pred_fallthru
      _
    // Predicated region
    $region10: #{tpu_custom_call.1} parent=1 // pred_check
      _
    $region11: #{tpu_custom_call.1} parent=1 // pred_check_branch
      %23 = sbr.rel (0) target = $region13
    $region12: #{tpu_custom_call.1} parent=1 // pred_region
      %24 = dma.done [#allocation4], 16
    $region13: #{tpu_custom_call.1} parent=1 // pred_fallthru
      _
    %25 = sfence
    %v26 = vld [vmem:[%s1] sm:$0x1]
    %v27 = vld [vmem:[%s1 + $0x1] sm:$0x1]
    %s28 = sld [smem:[#allocation2]]
    %s29 = sld [smem:[#allocation2 + $0x1]]
    %s30 = sld [smem:[#allocation2 + $0x2]]
    %s31 = sld [smem:[#allocation2 + $0x3]]
    %s32 = sld [smem:[#allocation2 + $0x4]]
    %s33 = sld [smem:[#allocation2 + $0x5]]
    %s34 = sld [smem:[#allocation2 + $0x6]]
    %s35 = sld [smem:[#allocation2 + $0x7]]
    %s36 = sld [smem:[#allocation2 + $0x8]]
    %v37 = vstv %s28
    %v38 = vmul.f32 %v26, %v37
    %v39 = vstv %s30
    %v40 = vmul.f32 %v27, %v39
    %v41 = vadd.f32 %v38, %v40
    %v42 = vstv %s32
    %v43 = vadd.f32 %v41, %v42
    %v44 = vxor.u32 %v43, 2147483648
    %v45 = vmul.f32 %v44, 1.442695
    %v46 = vpow.pop %v45
    %v47 = vadd.f32 %v46, 1.0
    %v48 = vrcp.pop %v47
    %v49 = vmul.f32 1.0, %v48
    %v50 = vstv %s29
    %v51 = vmul.f32 %v26, %v50
    %v52 = vstv %s31
    %v53 = vmul.f32 %v27, %v52
    %v54 = vadd.f32 %v51, %v53
    %v55 = vstv %s33
    %v56 = vadd.f32 %v54, %v55
    %v57 = vxor.u32 %v56, 2147483648
    %v58 = vmul.f32 %v57, 1.442695
    %v59 = vpow.pop %v58
    %v60 = vadd.f32 %v59, 1.0
    %v61 = vrcp.pop %v60
    %v62 = vmul.f32 1.0, %v61
    %v63 = vstv %s34
    %v64 = vmul.f32 %v49, %v63
    %v65 = vstv %s35
    %v66 = vmul.f32 %v62, %v65
    %v67 = vadd.f32 %v64, %v66
    %v68 = vstv %s36
    %v69 = vadd.f32 %v67, %v68
    %v70 = vxor.u32 %v69, 2147483648
    %v71 = vmul.f32 %v70, 1.442695
    %v72 = vpow.pop %v71
    %v73 = vadd.f32 %v72, 1.0
    %v74 = vrcp.pop %v73
    %v75 = vmul.f32 1.0, %v74
    %76 = vst [vmem:[#allocation5] sm:$0x1] %v75
    %v77 = vround.ne.pseudo %v75
    %78 = vst [vmem:[#allocation6] sm:$0x1] %v77
    // Predicated region
    $region14: #{tpu_custom_call.1} parent=1 // pred_check
      _
    $region15: #{tpu_custom_call.1} parent=1 // pred_check_branch
      %80 = sbr.rel (0) target = $region17
    $region16: #{tpu_custom_call.1} parent=1 // pred_region
      %s82 = ssub.s32 16, 16
      %83 = vsyncadd [#allocation3], %s82
      %s85 = sshll.u32 [#allocation5], 4
      %s86 = int_to_ptr.vmem [resolvable:$true] %s85
      %88 = dma.vmem_to_hbm [thread:$0]  %s86, 16, %s2, [#allocation3]
    $region17: #{tpu_custom_call.1} parent=1 // pred_fallthru
      _
    // Predicated region
    $region18: #{tpu_custom_call.1} parent=1 // pred_check
      _
    $region19: #{tpu_custom_call.1} parent=1 // pred_check_branch
      %90 = sbr.rel (0) target = $region21
    $region20: #{tpu_custom_call.1} parent=1 // pred_region
      %s92 = ssub.s32 16, 16
      %93 = vsyncadd [#allocation7], %s92
      %s95 = sshll.u32 [#allocation6], 4
      %s96 = int_to_ptr.vmem [resolvable:$true] %s95
      %98 = dma.vmem_to_hbm [thread:$0]  %s96, 16, %s3, [#allocation7]
    $region21: #{tpu_custom_call.1} parent=1 // pred_fallthru
      _
    // Predicated region
    $region22: #{tpu_custom_call.1} parent=1 // pred_check
      _
    $region23: #{tpu_custom_call.1} parent=1 // pred_check_branch
      %100 = sbr.rel (0) target = $region25
    $region24: #{tpu_custom_call.1} parent=1 // pred_region
      %101 = dma.done [#allocation3], 16
    $region25: #{tpu_custom_call.1} parent=1 // pred_fallthru
      _
    // Predicated region
    $region26: #{tpu_custom_call.1} parent=1 // pred_check
      _
    $region27: #{tpu_custom_call.1} parent=1 // pred_check_branch
      %103 = sbr.rel (0) target = $region29
    $region28: #{tpu_custom_call.1} parent=1 // pred_region
      %104 = dma.done [#allocation7], 16
    $region29: #{tpu_custom_call.1} parent=1 // pred_fallthru
      _
    %105 = vsyncpa [#allocation3], 1
    %106 = vsyncpa [#allocation7], 1
    %107 = vsyncpa [#allocation4], 1

</llo_original>
